<compile_context>
chip_gen: v6e
topology: v6e:2x2x1
jax: 0.10.0
libtpu: 0.0.40
codegen_flags: <defaults>
</compile_context>

<pallas_src>
import jax
import jax.numpy as jnp
from jax import lax
from jax.experimental import pallas as pl
from jax.experimental.pallas import tpu as pltpu


def _round_up(x, m):
    return (x + m - 1) // m * m


def _pad2(a, rows, cols):
    return jnp.pad(a, ((0, rows - a.shape[0]), (0, cols - a.shape[1])))


def mhmlp_kernel(ids_ref, emb_ref, w1_ref, b1_ref, w2_ref, b2_ref, w3_ref,
                 b3_ref, out_ref):
    tb, L = ids_ref.shape
    Vp = emb_ref.shape[0]
    inv_l = 1.0 / L

    # Embedding lookup + mean over the sequence, expressed as a scaled
    # bag-of-tokens matmul so it runs on the MXU:
    #   mean_l emb[ids[b, l]]  ==  (counts[b, :] / L) @ emb
    # The 1/L scale is folded into the one-hot values (no post-matmul scale).
    # TODO(synk): for a large vocabulary, replace the one-hot with scalar-
    # prefetched ids in SMEM + per-row DMA gather from an HBM-resident table.
    ids = ids_ref[...]                                            # (tb, L) i32
    vocab_iota = lax.broadcasted_iota(jnp.int32, (tb, L, Vp), 2)
    scaled_onehot = jnp.where(ids[:, :, None] == vocab_iota, inv_l, 0.0)
    counts = jnp.sum(scaled_onehot, axis=1)                       # (tb, Vp) f32
    pooled = jnp.dot(counts.astype(jnp.bfloat16), emb_ref[...],
                     preferred_element_type=jnp.float32)          # (tb, Dp) f32

    # fc1 + relu (bias add / relu in f32)
    h1 = jnp.maximum(
        jnp.dot(pooled.astype(jnp.bfloat16), w1_ref[...],
                preferred_element_type=jnp.float32) + b1_ref[...], 0.0)
    # TODO(synk): dropout_1 / dropout_2 are identity in eval mode; training-mode
    # stochastic masking (pltpu.prng_*) is intentionally omitted.

    # fc2 + relu
    h2 = jnp.maximum(
        jnp.dot(h1.astype(jnp.bfloat16), w2_ref[...],
                preferred_element_type=jnp.float32) + b2_ref[...], 0.0)

    # fc3 (logits, lane-dense padded; wrapper slices back to V)
    out_ref[...] = (
        jnp.dot(h2.astype(jnp.bfloat16), w3_ref[...],
                preferred_element_type=jnp.float32) + b3_ref[...])


def mhmlp_forward(ids, emb, w1, b1, w2, b2, w3, b3, *, tb=8):
    B, L = ids.shape
    V, D = emb.shape
    H1 = w1.shape[1]
    H2 = w2.shape[1]
    assert B % tb == 0, "batch must be a multiple of the batch tile"

    Vp = _round_up(V, 128)
    Dp = _round_up(D, 128)
    H1p = _round_up(H1, 128)
    H2p = _round_up(H2, 128)

    # Lane-dense bf16 parameters (zero padding preserves the math exactly).
    emb_p = _pad2(emb, Vp, Dp).astype(jnp.bfloat16)
    w1_p = _pad2(w1, Dp, H1p).astype(jnp.bfloat16)
    w2_p = _pad2(w2, H1p, H2p).astype(jnp.bfloat16)
    w3_p = _pad2(w3, H2p, Vp).astype(jnp.bfloat16)
    b1_p = _pad2(b1.reshape(1, -1).astype(jnp.float32), 1, H1p)
    b2_p = _pad2(b2.reshape(1, -1).astype(jnp.float32), 1, H2p)
    b3_p = _pad2(b3.reshape(1, -1).astype(jnp.float32), 1, Vp)

    grid_spec = pltpu.PrefetchScalarGridSpec(
        num_scalar_prefetch=0,
        grid=(B // tb,),
        in_specs=[
            pl.BlockSpec((tb, L), lambda i: (i, 0)),      # ids (batch-tiled)
            pl.BlockSpec((Vp, Dp), lambda i: (0, 0)),     # embedding (resident)
            pl.BlockSpec((Dp, H1p), lambda i: (0, 0)),    # w1
            pl.BlockSpec((1, H1p), lambda i: (0, 0)),     # b1
            pl.BlockSpec((H1p, H2p), lambda i: (0, 0)),   # w2
            pl.BlockSpec((1, H2p), lambda i: (0, 0)),     # b2
            pl.BlockSpec((H2p, Vp), lambda i: (0, 0)),    # w3
            pl.BlockSpec((1, Vp), lambda i: (0, 0)),      # b3
        ],
        out_specs=pl.BlockSpec((tb, Vp), lambda i: (i, 0)),
    )

    out_padded = pl.pallas_call(
        mhmlp_kernel,
        out_shape=jax.ShapeDtypeStruct((B, Vp), jnp.float32),
        grid_spec=grid_spec,
        compiler_params=pltpu.CompilerParams(
            dimension_semantics=("parallel",)),
    )(ids, emb_p, w1_p, b1_p, w2_p, b2_p, w3_p, b3_p)

    return out_padded[:, :V]


if __name__ == "__main__":
    # Small shapes consistent with the module (defaults scaled down a bit).
    B, L = 16, 8                 # batch, sequence length of token ids
    V = 100                      # vocab_size
    D = 128                      # input_dim (embedding dim)
    H1, H2 = 50, 15              # n_hidden_1, n_hidden_2

    key = jax.random.PRNGKey(0)
    k_ids, k_emb, k_w1, k_b1, k_w2, k_b2, k_w3, k_b3 = jax.random.split(key, 8)

    ids = jax.random.randint(k_ids, (B, L), 0, V, dtype=jnp.int32)

    # Deterministic parameter init (uniform, torch-Linear-style scaling).
    # Weights stored transposed as (in_dim, out_dim) so matmuls are x @ W.
    emb = jax.random.normal(k_emb, (V, D), dtype=jnp.float32)
    w1 = jax.random.uniform(k_w1, (D, H1), jnp.float32, -1.0, 1.0) / jnp.sqrt(D)
    b1 = jax.random.uniform(k_b1, (H1,), jnp.float32, -1.0, 1.0) / jnp.sqrt(D)
    w2 = jax.random.uniform(k_w2, (H1, H2), jnp.float32, -1.0, 1.0) / jnp.sqrt(H1)
    b2 = jax.random.uniform(k_b2, (H2,), jnp.float32, -1.0, 1.0) / jnp.sqrt(H1)
    w3 = jax.random.uniform(k_w3, (H2, V), jnp.float32, -1.0, 1.0) / jnp.sqrt(H2)
    b3 = jax.random.uniform(k_b3, (V,), jnp.float32, -1.0, 1.0) / jnp.sqrt(H2)

    out = mhmlp_forward(ids, emb, w1, b1, w2, b2, w3, b3)
    out = jax.block_until_ready(out)

    # Pure-JAX f32 reference (same eval-mode semantics as the torch module).
    pooled_ref = emb[ids].mean(axis=1)
    h1_ref = jnp.maximum(pooled_ref @ w1 + b1, 0.0)
    h2_ref = jnp.maximum(h1_ref @ w2 + b2, 0.0)
    ref = h2_ref @ w3 + b3

    assert out.shape == (B, V)
    # Kernel uses bf16 MXU operands with f32 accumulation -> bf16-level tolerance.
    assert jnp.allclose(out, ref, atol=3e-2, rtol=3e-2), (
        float(jnp.max(jnp.abs(out - ref))))

    print("KERNEL_OK")
</pallas_src>

<mosaic_0001>
module attributes {stable_mosaic.version = 11 : i64} {
  func.func @mhmlp_kernel(%arg0: i32, %arg1: memref<8x8xi32, #tpu.memory_space<vmem>>, %arg2: memref<128x128xbf16, #tpu.memory_space<vmem>>, %arg3: memref<128x128xbf16, #tpu.memory_space<vmem>>, %arg4: memref<1x128xf32, #tpu.memory_space<vmem>>, %arg5: memref<128x128xbf16, #tpu.memory_space<vmem>>, %arg6: memref<1x128xf32, #tpu.memory_space<vmem>>, %arg7: memref<128x128xbf16, #tpu.memory_space<vmem>>, %arg8: memref<1x128xf32, #tpu.memory_space<vmem>>, %arg9: memref<8x128xf32, #tpu.memory_space<vmem>>) attributes {dimension_semantics = [#tpu.dimension_semantics<parallel>], iteration_bounds = array<i64: 2>, scalar_prefetch = 0 : i64, scratch_operands = 0 : i64, tpu.core_type = #tpu.core_type<tc>, window_params = [{transform_indices = @transform_0, window_bounds = array<i64: 8, 8>}, {pipeline_mode = #tpu.pipeline_mode<synchronous>, transform_indices = @transform_1, window_bounds = array<i64: 128, 128>}, {pipeline_mode = #tpu.pipeline_mode<synchronous>, transform_indices = @transform_2, window_bounds = array<i64: 128, 128>}, {pipeline_mode = #tpu.pipeline_mode<synchronous>, transform_indices = @transform_3, window_bounds = array<i64: 1, 128>}, {pipeline_mode = #tpu.pipeline_mode<synchronous>, transform_indices = @transform_4, window_bounds = array<i64: 128, 128>}, {pipeline_mode = #tpu.pipeline_mode<synchronous>, transform_indices = @transform_5, window_bounds = array<i64: 1, 128>}, {pipeline_mode = #tpu.pipeline_mode<synchronous>, transform_indices = @transform_6, window_bounds = array<i64: 128, 128>}, {pipeline_mode = #tpu.pipeline_mode<synchronous>, transform_indices = @transform_7, window_bounds = array<i64: 1, 128>}, {transform_indices = @transform_8, window_bounds = array<i64: 8, 128>}]} {
    %c0 = arith.constant 0 : index
    %c0_0 = arith.constant 0 : index
    %0 = vector.load %arg1[%c0, %c0_0] : memref<8x8xi32, #tpu.memory_space<vmem>>, vector<8x8xi32>
    %1 = tpu.iota {dimensions = array<i32: 2>} : vector<8x8x128xi32>
    %2 = vector.shape_cast %0 : vector<8x8xi32> to vector<8x8x1xi32>
    %3 = vector.broadcast %2 : vector<8x8x1xi32> to vector<8x8x128xi32>
    %4 = arith.cmpi eq, %3, %1 : vector<8x8x128xi32>
    %cst = arith.constant 1.250000e-01 : f32
    %cst_1 = arith.constant 0.000000e+00 : f32
    %5 = vector.broadcast %cst : f32 to vector<8x8x128xf32>
    %6 = vector.broadcast %cst_1 : f32 to vector<8x8x128xf32>
    %7 = arith.select %4, %5, %6 : vector<8x8x128xi1>, vector<8x8x128xf32>
    %cst_2 = arith.constant dense<0.000000e+00> : vector<8x128xf32>
    %8 = vector.multi_reduction <add>, %7, %cst_2 [1] : vector<8x8x128xf32> to vector<8x128xf32>
    %9 = arith.truncf %8 : vector<8x128xf32> to vector<8x128xbf16>
    %c0_3 = arith.constant 0 : index
    %c0_4 = arith.constant 0 : index
    %10 = vector.load %arg2[%c0_3, %c0_4] : memref<128x128xbf16, #tpu.memory_space<vmem>>, vector<128x128xbf16>
    %cst_5 = arith.constant dense<0.000000e+00> : vector<8x128xf32>
    %11 = tpu.matmul %9, %10, %cst_5 {dimension_numbers = #tpu.dot_dimension_numbers<[1], [0], [0], [1], [0, 0, 1, 1], [], []>} : vector<8x128xbf16>, vector<128x128xbf16>, vector<8x128xf32> -> vector<8x128xf32>
    %12 = arith.truncf %11 : vector<8x128xf32> to vector<8x128xbf16>
    %c0_6 = arith.constant 0 : index
    %c0_7 = arith.constant 0 : index
    %13 = vector.load %arg3[%c0_6, %c0_7] : memref<128x128xbf16, #tpu.memory_space<vmem>>, vector<128x128xbf16>
    %cst_8 = arith.constant dense<0.000000e+00> : vector<8x128xf32>
    %14 = tpu.matmul %12, %13, %cst_8 {dimension_numbers = #tpu.dot_dimension_numbers<[1], [0], [0], [1], [0, 0, 1, 1], [], []>} : vector<8x128xbf16>, vector<128x128xbf16>, vector<8x128xf32> -> vector<8x128xf32>
    %c0_9 = arith.constant 0 : index
    %c0_10 = arith.constant 0 : index
    %15 = vector.load %arg4[%c0_9, %c0_10] : memref<1x128xf32, #tpu.memory_space<vmem>>, vector<1x128xf32>
    %16 = vector.broadcast %15 : vector<1x128xf32> to vector<8x128xf32>
    %17 = arith.addf %14, %16 : vector<8x128xf32>
    %cst_11 = arith.constant 0.000000e+00 : f32
    %18 = vector.broadcast %cst_11 : f32 to vector<8x128xf32>
    %19 = arith.maximumf %17, %18 : vector<8x128xf32>
    %20 = arith.truncf %19 : vector<8x128xf32> to vector<8x128xbf16>
    %c0_12 = arith.constant 0 : index
    %c0_13 = arith.constant 0 : index
    %21 = vector.load %arg5[%c0_12, %c0_13] : memref<128x128xbf16, #tpu.memory_space<vmem>>, vector<128x128xbf16>
    %cst_14 = arith.constant dense<0.000000e+00> : vector<8x128xf32>
    %22 = tpu.matmul %20, %21, %cst_14 {dimension_numbers = #tpu.dot_dimension_numbers<[1], [0], [0], [1], [0, 0, 1, 1], [], []>} : vector<8x128xbf16>, vector<128x128xbf16>, vector<8x128xf32> -> vector<8x128xf32>
    %c0_15 = arith.constant 0 : index
    %c0_16 = arith.constant 0 : index
    %23 = vector.load %arg6[%c0_15, %c0_16] : memref<1x128xf32, #tpu.memory_space<vmem>>, vector<1x128xf32>
    %24 = vector.broadcast %23 : vector<1x128xf32> to vector<8x128xf32>
    %25 = arith.addf %22, %24 : vector<8x128xf32>
    %cst_17 = arith.constant 0.000000e+00 : f32
    %26 = vector.broadcast %cst_17 : f32 to vector<8x128xf32>
    %27 = arith.maximumf %25, %26 : vector<8x128xf32>
    %28 = arith.truncf %27 : vector<8x128xf32> to vector<8x128xbf16>
    %c0_18 = arith.constant 0 : index
    %c0_19 = arith.constant 0 : index
    %29 = vector.load %arg7[%c0_18, %c0_19] : memref<128x128xbf16, #tpu.memory_space<vmem>>, vector<128x128xbf16>
    %cst_20 = arith.constant dense<0.000000e+00> : vector<8x128xf32>
    %30 = tpu.matmul %28, %29, %cst_20 {dimension_numbers = #tpu.dot_dimension_numbers<[1], [0], [0], [1], [0, 0, 1, 1], [], []>} : vector<8x128xbf16>, vector<128x128xbf16>, vector<8x128xf32> -> vector<8x128xf32>
    %c0_21 = arith.constant 0 : index
    %c0_22 = arith.constant 0 : index
    %31 = vector.load %arg8[%c0_21, %c0_22] : memref<1x128xf32, #tpu.memory_space<vmem>>, vector<1x128xf32>
    %32 = vector.broadcast %31 : vector<1x128xf32> to vector<8x128xf32>
    %33 = arith.addf %30, %32 : vector<8x128xf32>
    %c0_23 = arith.constant 0 : index
    %c0_24 = arith.constant 0 : index
    %34 = vector.load %arg9[%c0_23, %c0_24] : memref<8x128xf32, #tpu.memory_space<vmem>>, vector<8x128xf32>
    tpu.vector_store %arg9[%c0_23, %c0_24], %33 {strides = array<i32>} : memref<8x128xf32, #tpu.memory_space<vmem>>, vector<8x128xf32>,
    return
  }
  func.func @transform_0(%arg0: i32) -> (i32, i32) {
    %c0_i32 = arith.constant 0 : i32
    %c0_i32_0 = arith.constant 0 : i32
    return %arg0, %c0_i32 : i32, i32
  }
  func.func @transform_1(%arg0: i32) -> (i32, i32) {
    %c0_i32 = arith.constant 0 : i32
    %c0_i32_0 = arith.constant 0 : i32
    %c0_i32_1 = arith.constant 0 : i32
    return %c0_i32, %c0_i32_0 : i32, i32
  }
  func.func @transform_2(%arg0: i32) -> (i32, i32) {
    %c0_i32 = arith.constant 0 : i32
    %c0_i32_0 = arith.constant 0 : i32
    %c0_i32_1 = arith.constant 0 : i32
    return %c0_i32, %c0_i32_0 : i32, i32
  }
  func.func @transform_3(%arg0: i32) -> (i32, i32) {
    %c0_i32 = arith.constant 0 : i32
    %c0_i32_0 = arith.constant 0 : i32
    %c0_i32_1 = arith.constant 0 : i32
    return %c0_i32, %c0_i32_0 : i32, i32
  }
  func.func @transform_4(%arg0: i32) -> (i32, i32) {
    %c0_i32 = arith.constant 0 : i32
    %c0_i32_0 = arith.constant 0 : i32
    %c0_i32_1 = arith.constant 0 : i32
    return %c0_i32, %c0_i32_0 : i32, i32
  }
  func.func @transform_5(%arg0: i32) -> (i32, i32) {
    %c0_i32 = arith.constant 0 : i32
    %c0_i32_0 = arith.constant 0 : i32
    %c0_i32_1 = arith.constant 0 : i32
    return %c0_i32, %c0_i32_0 : i32, i32
  }
  func.func @transform_6(%arg0: i32) -> (i32, i32) {
    %c0_i32 = arith.constant 0 : i32
    %c0_i32_0 = arith.constant 0 : i32
    %c0_i32_1 = arith.constant 0 : i32
    return %c0_i32, %c0_i32_0 : i32, i32
  }
  func.func @transform_7(%arg0: i32) -> (i32, i32) {
    %c0_i32 = arith.constant 0 : i32
    %c0_i32_0 = arith.constant 0 : i32
    %c0_i32_1 = arith.constant 0 : i32
    return %c0_i32, %c0_i32_0 : i32, i32
  }
  func.func @transform_8(%arg0: i32) -> (i32, i32) {
    %c0_i32 = arith.constant 0 : i32
    %c0_i32_0 = arith.constant 0 : i32
    return %arg0, %c0_i32 : i32, i32
  }
}

</mosaic_0001>

<llo_original>
// kernel: tpu_custom_call.1
$region0: #{tpu_custom_call.1}
  #allocation0 [shape = 'u32[]', space=smem, size = 0x4, offset = 0x4, fixed_abs, tag = 'smem constant byte address 0x4 - core index']
  #allocation1 [shape = 'u32[144,128]{1,0:T(1,128)}', space=vmem, size = 0x12000, scoped, tag = 'internal scratch']
  %s0 = inlined_call_operand.vmem [shape: s32[16,8], index: 0, kind: input, shape index: {}]
  %s1 = inlined_call_operand.hbm [shape: bf16[128,128], index: 1, kind: input, shape index: {}]
  %s2 = inlined_call_operand.hbm [shape: bf16[128,128], index: 2, kind: input, shape index: {}]
  %s3 = inlined_call_operand.vmem [shape: f32[1,128], index: 3, kind: input, shape index: {}]
  %s4 = inlined_call_operand.hbm [shape: bf16[128,128], index: 4, kind: input, shape index: {}]
  %s5 = inlined_call_operand.vmem [shape: f32[1,128], index: 5, kind: input, shape index: {}]
  %s6 = inlined_call_operand.hbm [shape: bf16[128,128], index: 6, kind: input, shape index: {}]
  %s7 = inlined_call_operand.vmem [shape: f32[1,128], index: 7, kind: input, shape index: {}]
  %s8 = inlined_call_operand.hbm [shape: f32[16,128], index: 8, kind: output, shape index: {}]
  %s9 = sld [smem:[#allocation0]]
  $region81: #{tpu_custom_call.1} parent=0
    _
  %s11 = ssub.s32 1, %s9
  %s12 = scalar_select 0, %s11, %s9
  $region1: #{tpu_custom_call.1} parent=0
    #allocation2 [shape = 'u8[32768]{0}', space=vmem, size = 0x8000, scoped, tag = 'input window, operand 1, single buffered']
    #allocation3 [shape = 's32[2]{0}', space=sflag, size = 0x8, scoped, tag = 'scoped memory for tpu_custom_call.1']
    #allocation4 [shape = 's32[2]{0}', space=sflag, size = 0x8, scoped, tag = 'scoped memory for tpu_custom_call.1']
    #allocation5 [shape = 'u8[32768]{0}', space=vmem, size = 0x8000, scoped, tag = 'input window, operand 2, single buffered']
    #allocation6 [shape = 's32[1]{0}', space=sflag, size = 0x4, scoped, tag = 'scoped memory for tpu_custom_call.1']
    #allocation7 [shape = 'u8[32768]{0}', space=vmem, size = 0x8000, scoped, tag = 'input window, operand 4, single buffered']
    #allocation8 [shape = 'u8[32768]{0}', space=vmem, size = 0x8000, scoped, tag = 'input window, operand 6, single buffered']
    #allocation9 [shape = 's32[1]{0}', space=sflag, size = 0x4, scoped, tag = 'scoped memory for tpu_custom_call.1']
    #allocation10 [shape = 'u8[8192]{0}', space=vmem, size = 0x2000, scoped, tag = 'output window, operand 0']
    %13 = vsyncpa [#allocation3], 0
    %14 = vsyncpa [#allocation6], 0
    %15 = vsyncpa [#allocation9], 0
    %16 = vsyncpa [#allocation4], 0
    %s17 = scalar_lea.sflag [#allocation4], 1
    %18 = vsyncpa %s17, 0
    loop: start=0, step=1, limit=4
    $region2: #{tpu_custom_call.1} parent=1 // loop_pre_header
      _
    $region3: #{tpu_custom_call.1} parent=1 // loop_header
      %s20 = sphi 0, %s24
      %p21 = scmp.ge.s32.totalorder %s20, 4
      %s30 = sphi 0, %s32
      %s33 = sphi 0, %s30
      %s34 = sphi 0, %s33
      %s50 = sphi 0, %s34
      %s54 = sphi 0, %s54
      %s56 = sphi 0, %s54
      %s57 = sphi 0, %s56
      %s71 = sphi 0, %s57
      %s75 = sphi 0, %s75
      %s77 = sphi 0, %s75
      %s78 = sphi 0, %s77
      %s92 = sphi 0, %s78
      %s96 = sphi 0, %s96
      %s98 = sphi 0, %s96
      %s99 = sphi 0, %s98
      %s113 = sphi 0, %s99
      %s117 = sphi 0, %s117
      %s119 = sphi 0, %s117
      %s120 = sphi 0, %s119
      %s134 = sphi 0, %s120
      %s138 = sphi 0, %s138
      %s140 = sphi 0, %s138
      %s141 = sphi 0, %s140
      %s155 = sphi 0, %s141
      %s159 = sphi 0, %s159
      %s161 = sphi 0, %s159
      %s162 = sphi 0, %s161
      %s176 = sphi 0, %s162
      %s180 = sphi 0, %s180
      %s182 = sphi 0, %s180
      %s183 = sphi 0, %s182
      %s197 = sphi 0, %s183
      %s203 = sphi 0, %s205
      %s206 = sphi 0, %s203
      %s207 = sphi 0, %s206
      %s223 = sphi 0, %s207
    $region4: #{tpu_custom_call.1} parent=1 // loop_header_branch
      %23 = sbr.rel (%p21) target = $region8
    $region5: #{tpu_custom_call.1} parent=1 // loop_body
      %s25 = ssub.s32 %s20, 1
      %s26 = ssub.s32 %s20, 2
      %s27 = sadd.s32 %s20, 1
      %s28 = ssub.s32 %s20, %s27
      %p29 = scmp.eq.s32.totalorder %s28, 0
      %s31 = sadd.s32 %s30, 1
      %s32 = scalar_select %p29, %s30, %s31
      %p35 = pneg %p29
      %p36 = scmp.eq.s32.totalorder %s20, 1
      %p37 = por %p35, %p36
      %p38 = scmp.ne.s32.totalorder %s30, %s33
      %p39 = scmp.eq.s32.totalorder %s20, 0
      %p40 = por %p38, %p39
      %p41 = scmp.ne.s32.totalorder %s30, %s33
      %p42 = scmp.eq.s32.totalorder %s25, 1
      %p43 = por %p41, %p42
      %p44 = scmp.ne.s32.totalorder %s33, %s34
      %p45 = scmp.eq.s32.totalorder %s25, 0
      %p46 = por %p44, %p45
      %p47 = scmp.ne.s32.totalorder %s33, %s34
      %p48 = scmp.eq.s32.totalorder %s26, 1
      %p49 = por %p47, %p48
      %p51 = scmp.ne.s32.totalorder %s34, %s50
      %p52 = scmp.eq.s32.totalorder %s26, 0
      %p53 = por %p51, %p52
      %s55 = sadd.s32 %s54, 1
      %p58 = scmp.eq.s32.totalorder %s20, 1
      %p59 = scmp.ne.s32.totalorder %s54, %s56
      %p60 = scmp.eq.s32.totalorder %s20, 0
      %p61 = por %p59, %p60
      %p62 = scmp.ne.s32.totalorder %s54, %s56
      %p63 = scmp.eq.s32.totalorder %s25, 1
      %p64 = por %p62, %p63
      %p65 = scmp.ne.s32.totalorder %s56, %s57
      %p66 = scmp.eq.s32.totalorder %s25, 0
      %p67 = por %p65, %p66
      %p68 = scmp.ne.s32.totalorder %s56, %s57
      %p69 = scmp.eq.s32.totalorder %s26, 1
      %p70 = por %p68, %p69
      %p72 = scmp.ne.s32.totalorder %s57, %s71
      %p73 = scmp.eq.s32.totalorder %s26, 0
      %p74 = por %p72, %p73
      %s76 = sadd.s32 %s75, 1
      %p79 = scmp.eq.s32.totalorder %s20, 1
      %p80 = scmp.ne.s32.totalorder %s75, %s77
      %p81 = scmp.eq.s32.totalorder %s20, 0
      %p82 = por %p80, %p81
      %p83 = scmp.ne.s32.totalorder %s75, %s77
      %p84 = scmp.eq.s32.totalorder %s25, 1
      %p85 = por %p83, %p84
      %p86 = scmp.ne.s32.totalorder %s77, %s78
      %p87 = scmp.eq.s32.totalorder %s25, 0
      %p88 = por %p86, %p87
      %p89 = scmp.ne.s32.totalorder %s77, %s78
      %p90 = scmp.eq.s32.totalorder %s26, 1
      %p91 = por %p89, %p90
      %p93 = scmp.ne.s32.totalorder %s78, %s92
      %p94 = scmp.eq.s32.totalorder %s26, 0
      %p95 = por %p93, %p94
      %s97 = sadd.s32 %s96, 1
      %p100 = scmp.eq.s32.totalorder %s20, 1
      %p101 = scmp.ne.s32.totalorder %s96, %s98
      %p102 = scmp.eq.s32.totalorder %s20, 0
      %p103 = por %p101, %p102
      %p104 = scmp.ne.s32.totalorder %s96, %s98
      %p105 = scmp.eq.s32.totalorder %s25, 1
      %p106 = por %p104, %p105
      %p107 = scmp.ne.s32.totalorder %s98, %s99
      %p108 = scmp.eq.s32.totalorder %s25, 0
      %p109 = por %p107, %p108
      %p110 = scmp.ne.s32.totalorder %s98, %s99
      %p111 = scmp.eq.s32.totalorder %s26, 1
      %p112 = por %p110, %p111
      %p114 = scmp.ne.s32.totalorder %s99, %s113
      %p115 = scmp.eq.s32.totalorder %s26, 0
      %p116 = por %p114, %p115
      %s118 = sadd.s32 %s117, 1
      %p121 = scmp.eq.s32.totalorder %s20, 1
      %p122 = scmp.ne.s32.totalorder %s117, %s119
      %p123 = scmp.eq.s32.totalorder %s20, 0
      %p124 = por %p122, %p123
      %p125 = scmp.ne.s32.totalorder %s117, %s119
      %p126 = scmp.eq.s32.totalorder %s25, 1
      %p127 = por %p125, %p126
      %p128 = scmp.ne.s32.totalorder %s119, %s120
      %p129 = scmp.eq.s32.totalorder %s25, 0
      %p130 = por %p128, %p129
      %p131 = scmp.ne.s32.totalorder %s119, %s120
      %p132 = scmp.eq.s32.totalorder %s26, 1
      %p133 = por %p131, %p132
      %p135 = scmp.ne.s32.totalorder %s120, %s134
      %p136 = scmp.eq.s32.totalorder %s26, 0
      %p137 = por %p135, %p136
      %s139 = sadd.s32 %s138, 1
      %p142 = scmp.eq.s32.totalorder %s20, 1
      %p143 = scmp.ne.s32.totalorder %s138, %s140
      %p144 = scmp.eq.s32.totalorder %s20, 0
      %p145 = por %p143, %p144
      %p146 = scmp.ne.s32.totalorder %s138, %s140
      %p147 = scmp.eq.s32.totalorder %s25, 1
      %p148 = por %p146, %p147
      %p149 = scmp.ne.s32.totalorder %s140, %s141
      %p150 = scmp.eq.s32.totalorder %s25, 0
      %p151 = por %p149, %p150
      %p152 = scmp.ne.s32.totalorder %s140, %s141
      %p153 = scmp.eq.s32.totalorder %s26, 1
      %p154 = por %p152, %p153
      %p156 = scmp.ne.s32.totalorder %s141, %s155
      %p157 = scmp.eq.s32.totalorder %s26, 0
      %p158 = por %p156, %p157
      %s160 = sadd.s32 %s159, 1
      %p163 = scmp.eq.s32.totalorder %s20, 1
      %p164 = scmp.ne.s32.totalorder %s159, %s161
      %p165 = scmp.eq.s32.totalorder %s20, 0
      %p166 = por %p164, %p165
      %p167 = scmp.ne.s32.totalorder %s159, %s161
      %p168 = scmp.eq.s32.totalorder %s25, 1
      %p169 = por %p167, %p168
      %p170 = scmp.ne.s32.totalorder %s161, %s162
      %p171 = scmp.eq.s32.totalorder %s25, 0
      %p172 = por %p170, %p171
      %p173 = scmp.ne.s32.totalorder %s161, %s162
      %p174 = scmp.eq.s32.totalorder %s26, 1
      %p175 = por %p173, %p174
      %p177 = scmp.ne.s32.totalorder %s162, %s176
      %p178 = scmp.eq.s32.totalorder %s26, 0
      %p179 = por %p177, %p178
      %s181 = sadd.s32 %s180, 1
      %p184 = scmp.eq.s32.totalorder %s20, 1
      %p185 = scmp.ne.s32.totalorder %s180, %s182
      %p186 = scmp.eq.s32.totalorder %s20, 0
      %p187 = por %p185, %p186
      %p188 = scmp.ne.s32.totalorder %s180, %s182
      %p189 = scmp.eq.s32.totalorder %s25, 1
      %p190 = por %p188, %p189
      %p191 = scmp.ne.s32.totalorder %s182, %s183
      %p192 = scmp.eq.s32.totalorder %s25, 0
      %p193 = por %p191, %p192
      %p194 = scmp.ne.s32.totalorder %s182, %s183
      %p195 = scmp.eq.s32.totalorder %s26, 1
      %p196 = por %p194, %p195
      %p198 = scmp.ne.s32.totalorder %s183, %s197
      %p199 = scmp.eq.s32.totalorder %s26, 0
      %p200 = por %p198, %p199
      %s201 = ssub.s32 %s20, %s27
      %p202 = scmp.eq.s32.totalorder %s201, 0
      %s204 = sadd.s32 %s203, 1
      %s205 = scalar_select %p202, %s203, %s204
      %p208 = pneg %p202
      %p209 = scmp.eq.s32.totalorder %s20, 1
      %p210 = por %p208, %p209
      %p211 = scmp.ne.s32.totalorder %s203, %s206
      %p212 = scmp.eq.s32.totalorder %s20, 0
      %p213 = por %p211, %p212
      %p214 = scmp.ne.s32.totalorder %s203, %s206
      %p215 = scmp.eq.s32.totalorder %s25, 1
      %p216 = por %p214, %p215
      %p217 = scmp.ne.s32.totalorder %s206, %s207
      %p218 = scmp.eq.s32.totalorder %s25, 0
      %p219 = por %p217, %p218
      %p220 = scmp.ne.s32.totalorder %s206, %s207
      %p221 = scmp.eq.s32.totalorder %s26, 1
      %p222 = por %p220, %p221
      %p224 = scmp.ne.s32.totalorder %s207, %s223
      %p225 = scmp.eq.s32.totalorder %s26, 0
      %p226 = por %p224, %p225
      %p227 = scmp.le.s32.totalorder 1, %s20
      %p228 = scmp.lt.s32.totalorder %s20, 3
      %p229 = pnand %p227, %p228
      %p230 = pneg %p229
      // Predicated region
      $region9: #{tpu_custom_call.1} parent=5 // pred_check
        _
      $region10: #{tpu_custom_call.1} parent=5 // pred_check_branch
        %232 = sbr.rel (%p229) target = $region12
      $region11: #{tpu_custom_call.1} parent=5 // pred_region
        %s233 = ssub.s32 %s20, 1
        // Predicated region
        $region13: #{tpu_custom_call.1} parent=11 // pred_check
          %p234 = pneg %p67
        $region14: #{tpu_custom_call.1} parent=11 // pred_check_branch
          %236 = sbr.rel (%p234) target = $region16
        $region15: #{tpu_custom_call.1} parent=11 // pred_region
          %s238 = ssub.s32 1024, 1024
          %239 = vsyncadd [#allocation3], %s238
          %s240 = sshll.u32 [#allocation2], 4
          %s241 = int_to_ptr.vmem [resolvable:$true] %s240
          %246 = dma.hbm_to_vmem [thread:$0]  %s1, 1024, %s241, [#allocation3], 64, 64, 4
        $region16: #{tpu_custom_call.1} parent=11 // pred_fallthru
          _
        // Predicated region
        $region17: #{tpu_custom_call.1} parent=11 // pred_check
          %p247 = pneg %p88
        $region18: #{tpu_custom_call.1} parent=11 // pred_check_branch
          %249 = sbr.rel (%p247) target = $region20
        $region19: #{tpu_custom_call.1} parent=11 // pred_region
          %s251 = ssub.s32 1024, 1024
          %252 = vsyncadd [#allocation6], %s251
          %s253 = sshll.u32 [#allocation5], 4
          %s254 = int_to_ptr.vmem [resolvable:$true] %s253
          %259 = dma.hbm_to_vmem [thread:$0]  %s2, 1024, %s254, [#allocation6], 64, 64, 4
        $region20: #{tpu_custom_call.1} parent=11 // pred_fallthru
          _
        // Predicated region
        $region21: #{tpu_custom_call.1} parent=11 // pred_check
          %p260 = pneg %p109
        $region22: #{tpu_custom_call.1} parent=11 // pred_check_branch
          %262 = sbr.rel (%p260) target = $region24
        $region23: #{tpu_custom_call.1} parent=11 // pred_region
          _
        $region24: #{tpu_custom_call.1} parent=11 // pred_fallthru
          _
        // Predicated region
        $region25: #{tpu_custom_call.1} parent=11 // pred_check
          %p263 = pneg %p130
        $region26: #{tpu_custom_call.1} parent=11 // pred_check_branch
          %265 = sbr.rel (%p263) target = $region28
        $region27: #{tpu_custom_call.1} parent=11 // pred_region
          %s267 = ssub.s32 1024, 1024
          %268 = vsyncadd [#allocation6], %s267
          %s269 = sshll.u32 [#allocation7], 4
          %s270 = int_to_ptr.vmem [resolvable:$true] %s269
          %275 = dma.hbm_to_vmem [thread:$0]  %s4, 1024, %s270, [#allocation6], 64, 64, 4
        $region28: #{tpu_custom_call.1} parent=11 // pred_fallthru
          _
        // Predicated region
        $region29: #{tpu_custom_call.1} parent=11 // pred_check
          %p276 = pneg %p151
        $region30: #{tpu_custom_call.1} parent=11 // pred_check_branch
          %278 = sbr.rel (%p276) target = $region32
        $region31: #{tpu_custom_call.1} parent=11 // pred_region
          _
        $region32: #{tpu_custom_call.1} parent=11 // pred_fallthru
          _
        // Predicated region
        $region33: #{tpu_custom_call.1} parent=11 // pred_check
          %p279 = pneg %p172
        $region34: #{tpu_custom_call.1} parent=11 // pred_check_branch
          %281 = sbr.rel (%p279) target = $region36
        $region35: #{tpu_custom_call.1} parent=11 // pred_region
          %s283 = ssub.s32 1024, 1024
          %284 = vsyncadd [#allocation9], %s283
          %s285 = sshll.u32 [#allocation8], 4
          %s286 = int_to_ptr.vmem [resolvable:$true] %s285
          %291 = dma.hbm_to_vmem [thread:$0]  %s6, 1024, %s286, [#allocation9], 64, 64, 4
        $region36: #{tpu_custom_call.1} parent=11 // pred_fallthru
          _
        // Predicated region
        $region37: #{tpu_custom_call.1} parent=11 // pred_check
          %p292 = pneg %p193
        $region38: #{tpu_custom_call.1} parent=11 // pred_check_branch
          %294 = sbr.rel (%p292) target = $region40
        $region39: #{tpu_custom_call.1} parent=11 // pred_region
          _
        $region40: #{tpu_custom_call.1} parent=11 // pred_fallthru
          _
      $region12: #{tpu_custom_call.1} parent=5 // pred_fallthru
        _
      %p295 = scmp.lt.s32.totalorder %s20, 2
      // Predicated region
      $region41: #{tpu_custom_call.1} parent=5 // pred_check
        %p296 = pneg %p295
      $region42: #{tpu_custom_call.1} parent=5 // pred_check_branch
        %298 = sbr.rel (%p296) target = $region44
      $region43: #{tpu_custom_call.1} parent=5 // pred_region
        // Predicated region
        $region45: #{tpu_custom_call.1} parent=43 // pred_check
          %p299 = pneg %p40
        $region46: #{tpu_custom_call.1} parent=43 // pred_check_branch
          %301 = sbr.rel (%p299) target = $region48
        $region47: #{tpu_custom_call.1} parent=43 // pred_region
          %p302 = scmp.lt.s32.totalorder %s20, 1
          %s303 = scalar_select %p302, %s20, 1
          %s304 = smul.addr %s303, 8
          %s305 = scalar_lea.vmem %s0, %s304
        $region48: #{tpu_custom_call.1} parent=43 // pred_fallthru
          _
      $region44: #{tpu_custom_call.1} parent=5 // pred_fallthru
        _
      %p306 = scmp.le.s32.totalorder 1, %s20
      %p307 = scmp.lt.s32.totalorder %s20, 3
      %p308 = pnand %p306, %p307
      %p309 = pneg %p308
      // Predicated region
      $region49: #{tpu_custom_call.1} parent=5 // pred_check
        _
      $region50: #{tpu_custom_call.1} parent=5 // pred_check_branch
        %311 = sbr.rel (%p308) target = $region52
      $region51: #{tpu_custom_call.1} parent=5 // pred_region
        %s312 = ssub.s32 %s20, 1
        // Predicated region
        $region53: #{tpu_custom_call.1} parent=51 // pred_check
          %p313 = pneg %p67
        $region54: #{tpu_custom_call.1} parent=51 // pred_check_branch
          %315 = sbr.rel (%p313) target = $region56
        $region55: #{tpu_custom_call.1} parent=51 // pred_region
          %316 = dma.done [#allocation3], 1024
        $region56: #{tpu_custom_call.1} parent=51 // pred_fallthru
          _
        // Predicated region
        $region57: #{tpu_custom_call.1} parent=51 // pred_check
          %p317 = pneg %p88
        $region58: #{tpu_custom_call.1} parent=51 // pred_check_branch
          %319 = sbr.rel (%p317) target = $region60
        $region59: #{tpu_custom_call.1} parent=51 // pred_region
          %320 = dma.done [#allocation6], 1024
        $region60: #{tpu_custom_call.1} parent=51 // pred_fallthru
          _
        // Predicated region
        $region61: #{tpu_custom_call.1} parent=51 // pred_check
          %p321 = pneg %p130
        $region62: #{tpu_custom_call.1} parent=51 // pred_check_branch
          %323 = sbr.rel (%p321) target = $region64
        $region63: #{tpu_custom_call.1} parent=51 // pred_region
          %324 = dma.done [#allocation6], 1024
        $region64: #{tpu_custom_call.1} parent=51 // pred_fallthru
          _
        // Predicated region
        $region65: #{tpu_custom_call.1} parent=51 // pred_check
          %p325 = pneg %p172
        $region66: #{tpu_custom_call.1} parent=51 // pred_check_branch
          %327 = sbr.rel (%p325) target = $region68
        $region67: #{tpu_custom_call.1} parent=51 // pred_region
          %328 = dma.done [#allocation9], 1024
        $region68: #{tpu_custom_call.1} parent=51 // pred_fallthru
          _
        %p329 = scmp.lt.s32.totalorder %s25, 1
        %s330 = scalar_select %p329, %s25, 1
        %s331 = smul.addr %s330, 8
        %s332 = scalar_lea.vmem %s0, %s331
        %p333 = pneg %p46
        %p334 = pneg %p43
        %p335 = pneg %p67
        %p336 = pneg %p64
        %p337 = pneg %p88
        %p338 = pneg %p85
        %p339 = pneg %p109
        %p340 = pneg %p106
        %p341 = pneg %p130
        %p342 = pneg %p127
        %p343 = pneg %p151
        %p344 = pneg %p148
        %p345 = pneg %p172
        %p346 = pneg %p169
        %p347 = pneg %p193
        %p348 = pneg %p190
        %p349 = pneg %p219
        %p350 = pneg %p216
        %s351 = sand.u32 %s206, 1
        %s352 = scalar_lea.sflag [#allocation4], %s351
        %s353 = sand.u32 %s206, 1
        %s354 = smul.addr %s353, 8
        %s355 = scalar_lea.vmem [#allocation10], %s354
        %p356 = scmp.lt.s32.totalorder %s25, 1
        %s357 = scalar_select %p356, %s25, 1
        %s358 = smul.addr %s357, 8
        %s359 = scalar_lea.vmem %s0, %s358
        %v361 = vld [vmem:[%s359] sm:$0xff]
        %v362 = vlaneseq
        %v363 = vand.u32 %v362, 127
        %v364 = vlaneseq
        %v365 = vshrl.u32 %v364, 7
        %v366 = vsub.s32 0, %v365
        %v367 = vrot.slane %v361, %v366
        %369 = vbcast.lane.b32.xlu0 %v367, 256
        %v370 = vpop.permute.xlu0 %369
        %v371 = vlaneseq
        %v372 = vshrl.u32 %v371, 7
        %v373 = vsub.s32 1, %v372
        %v374 = vrot.slane %v361, %v373
        %376 = vbcast.lane.b32.xlu0 %v374, 256
        %v377 = vpop.permute.xlu0 %376
        %v378 = vlaneseq
        %v379 = vshrl.u32 %v378, 7
        %v380 = vsub.s32 2, %v379
        %v381 = vrot.slane %v361, %v380
        %383 = vbcast.lane.b32.xlu0 %v381, 256
        %v384 = vpop.permute.xlu0 %383
        %v385 = vlaneseq
        %v386 = vshrl.u32 %v385, 7
        %v387 = vsub.s32 3, %v386
        %v388 = vrot.slane %v361, %v387
        %390 = vbcast.lane.b32.xlu0 %v388, 256
        %v391 = vpop.permute.xlu0 %390
        %v392 = vlaneseq
        %v393 = vshrl.u32 %v392, 7
        %v394 = vsub.s32 4, %v393
        %v395 = vrot.slane %v361, %v394
        %397 = vbcast.lane.b32.xlu0 %v395, 256
        %v398 = vpop.permute.xlu0 %397
        %v399 = vlaneseq
        %v400 = vshrl.u32 %v399, 7
        %v401 = vsub.s32 5, %v400
        %v402 = vrot.slane %v361, %v401
        %404 = vbcast.lane.b32.xlu0 %v402, 256
        %v405 = vpop.permute.xlu0 %404
        %v406 = vlaneseq
        %v407 = vshrl.u32 %v406, 7
        %v408 = vsub.s32 6, %v407
        %v409 = vrot.slane %v361, %v408
        %411 = vbcast.lane.b32.xlu0 %v409, 256
        %v412 = vpop.permute.xlu0 %411
        %v413 = vlaneseq
        %v414 = vshrl.u32 %v413, 7
        %v415 = vsub.s32 7, %v414
        %v416 = vrot.slane %v361, %v415
        %418 = vbcast.lane.b32.xlu0 %v416, 256
        %v419 = vpop.permute.xlu0 %418
        %vm420 = vcmp.eq.s32.totalorder %v370, %v363
        %vm421 = vcmp.eq.s32.totalorder %v377, %v363
        %vm422 = vcmp.eq.s32.totalorder %v384, %v363
        %vm423 = vcmp.eq.s32.totalorder %v391, %v363
        %vm424 = vcmp.eq.s32.totalorder %v398, %v363
        %vm425 = vcmp.eq.s32.totalorder %v405, %v363
        %vm426 = vcmp.eq.s32.totalorder %v412, %v363
        %vm427 = vcmp.eq.s32.totalorder %v419, %v363
        %v428 = vsel %vm420, 0.125, 0.0
        %v429 = vsel %vm421, 0.125, 0.0
        %v430 = vsel %vm422, 0.125, 0.0
        %v431 = vsel %vm423, 0.125, 0.0
        %v432 = vsel %vm424, 0.125, 0.0
        %v433 = vsel %vm425, 0.125, 0.0
        %v434 = vsel %vm426, 0.125, 0.0
        %v435 = vsel %vm427, 0.125, 0.0
        %v436 = vrot.slane %v428, 4
        %v437 = vadd.f32 %v428, %v436
        %v438 = vrot.slane %v437, 2
        %v439 = vadd.f32 %v437, %v438
        %v440 = vrot.slane %v439, 1
        %v441 = vadd.f32 %v439, %v440
        %v442 = vrot.slane %v429, 4
        %v443 = vadd.f32 %v429, %v442
        %v444 = vrot.slane %v443, 2
        %v445 = vadd.f32 %v443, %v444
        %v446 = vrot.slane %v445, 1
        %v447 = vadd.f32 %v445, %v446
        %v448 = vrot.slane %v430, 4
        %v449 = vadd.f32 %v430, %v448
        %v450 = vrot.slane %v449, 2
        %v451 = vadd.f32 %v449, %v450
        %v452 = vrot.slane %v451, 1
        %v453 = vadd.f32 %v451, %v452
        %v454 = vrot.slane %v431, 4
        %v455 = vadd.f32 %v431, %v454
        %v456 = vrot.slane %v455, 2
        %v457 = vadd.f32 %v455, %v456
        %v458 = vrot.slane %v457, 1
        %v459 = vadd.f32 %v457, %v458
        %v460 = vrot.slane %v432, 4
        %v461 = vadd.f32 %v432, %v460
        %v462 = vrot.slane %v461, 2
        %v463 = vadd.f32 %v461, %v462
        %v464 = vrot.slane %v463, 1
        %v465 = vadd.f32 %v463, %v464
        %v466 = vrot.slane %v433, 4
        %v467 = vadd.f32 %v433, %v466
        %v468 = vrot.slane %v467, 2
        %v469 = vadd.f32 %v467, %v468
        %v470 = vrot.slane %v469, 1
        %v471 = vadd.f32 %v469, %v470
        %v472 = vrot.slane %v434, 4
        %v473 = vadd.f32 %v434, %v472
        %v474 = vrot.slane %v473, 2
        %v475 = vadd.f32 %v473, %v474
        %v476 = vrot.slane %v475, 1
        %v477 = vadd.f32 %v475, %v476
        %v478 = vrot.slane %v435, 4
        %v479 = vadd.f32 %v435, %v478
        %v480 = vrot.slane %v479, 2
        %v481 = vadd.f32 %v479, %v480
        %v482 = vrot.slane %v481, 1
        %v483 = vadd.f32 %v481, %v482
        %v484 = vpack.c.bf16 %v441, %v441
        %v485 = vpack.c.bf16 %v447, %v447
        %v486 = vpack.c.bf16 %v453, %v453
        %v487 = vpack.c.bf16 %v459, %v459
        %v488 = vpack.c.bf16 %v465, %v465
        %v489 = vpack.c.bf16 %v471, %v471
        %v490 = vpack.c.bf16 %v477, %v477
        %v491 = vpack.c.bf16 %v483, %v483
        %v492 = vld [vmem:[#allocation2] sm:$0xf]
        %v493 = vld [vmem:[#allocation2 + $0x4] sm:$0xf]
        %v494 = vld [vmem:[#allocation2 + $0x8] sm:$0xf]
        %v495 = vld [vmem:[#allocation2 + $0xc] sm:$0xf]
        %v496 = vld [vmem:[#allocation2 + $0x10] sm:$0xf]
        %v497 = vld [vmem:[#allocation2 + $0x14] sm:$0xf]
        %v498 = vld [vmem:[#allocation2 + $0x18] sm:$0xf]
        %v499 = vld [vmem:[#allocation2 + $0x1c] sm:$0xf]
        %v500 = vld [vmem:[#allocation2 + $0x20] sm:$0xf]
        %v501 = vld [vmem:[#allocation2 + $0x24] sm:$0xf]
        %v502 = vld [vmem:[#allocation2 + $0x28] sm:$0xf]
        %v503 = vld [vmem:[#allocation2 + $0x2c] sm:$0xf]
        %v504 = vld [vmem:[#allocation2 + $0x30] sm:$0xf]
        %v505 = vld [vmem:[#allocation2 + $0x34] sm:$0xf]
        %v506 = vld [vmem:[#allocation2 + $0x38] sm:$0xf]
        %v507 = vld [vmem:[#allocation2 + $0x3c] sm:$0xf]
        %v516 = vunpack.c.l.b16 %v484
        %v517 = vunpack.c.l.b16 %v485
        %v518 = vunpack.c.l.b16 %v486
        %v519 = vunpack.c.l.b16 %v487
        %v520 = vunpack.c.l.b16 %v488
        %v521 = vunpack.c.l.b16 %v489
        %v522 = vunpack.c.l.b16 %v490
        %v523 = vunpack.c.l.b16 %v491
        %vm524 = vcmask 1041409
        %v525 = vsel %vm524, %v517, %v516
        %vm526 = vcmask 1042434
        %v527 = vsel %vm526, %v518, %v525
        %vm528 = vcmask 1043459
        %v529 = vsel %vm528, %v519, %v527
        %vm530 = vcmask 1044484
        %v531 = vsel %vm530, %v520, %v529
        %vm532 = vcmask 1045509
        %v533 = vsel %vm532, %v521, %v531
        %vm534 = vcmask 1046534
        %v535 = vsel %vm534, %v522, %v533
        %vm536 = vcmask 1047559
        %v537 = vsel %vm536, %v523, %v535
        %v538 = vpack.c.b16 %v537, %v537
        %v556 = vunpack.c.l.b16 %v492
        %v557 = vunpack.c.l.b16 %v493
        %v558 = vunpack.c.l.b16 %v494
        %v559 = vunpack.c.l.b16 %v495
        %v560 = vunpack.c.l.b16 %v496
        %v561 = vunpack.c.l.b16 %v497
        %v562 = vunpack.c.l.b16 %v498
        %v563 = vunpack.c.l.b16 %v499
        %v564 = vunpack.c.l.b16 %v500
        %v565 = vunpack.c.l.b16 %v501
        %v566 = vunpack.c.l.b16 %v502
        %v567 = vunpack.c.l.b16 %v503
        %v568 = vunpack.c.l.b16 %v504
        %v569 = vunpack.c.l.b16 %v505
        %v570 = vunpack.c.l.b16 %v506
        %v571 = vunpack.c.l.b16 %v507
        %v572 = vpack.c.b16 %v557, %v556
        %v573 = vpack.c.b16 %v559, %v558
        %v574 = vpack.c.b16 %v561, %v560
        %v575 = vpack.c.b16 %v563, %v562
        %v576 = vpack.c.b16 %v565, %v564
        %v577 = vpack.c.b16 %v567, %v566
        %v578 = vpack.c.b16 %v569, %v568
        %v579 = vpack.c.b16 %v571, %v570
        %588 = vmatprep.subr.bf16.mxu0 0
        %589 = vmatpush1.bf16.msra.mxu0 %v579
        %590 = vmatprep.subr.bf16.mxu0 0
        %591 = vmatpush1.bf16.msra.mxu0 %v578
        %592 = vmatprep.subr.bf16.mxu0 0
        %593 = vmatpush1.bf16.msra.mxu0 %v577
        %594 = vmatprep.subr.bf16.mxu0 0
        %595 = vmatpush1.bf16.msra.mxu0 %v576
        %596 = vmatprep.subr.bf16.mxu0 0
        %597 = vmatpush1.bf16.msra.mxu0 %v575
        %598 = vmatprep.subr.bf16.mxu0 0
        %599 = vmatpush1.bf16.msra.mxu0 %v574
        %600 = vmatprep.subr.bf16.mxu0 0
        %601 = vmatpush1.bf16.msra.mxu0 %v573
        %602 = vmatprep.subr.bf16.mxu0 0
        %603 = vmatpush1.bf16.msra.mxu0 %v572
        %604 = vmatprep.subr.bf16.mxu0 0
        %605 = vmatpush2.bf16.msra.mxu0 0
        %606 = vmatprep.subr.bf16.mxu0 0
        %607 = vmatpush2.bf16.msra.mxu0 0
        %608 = vmatprep.subr.bf16.mxu0 0
        %609 = vmatpush2.bf16.msra.mxu0 0
        %610 = vmatprep.subr.bf16.mxu0 0
        %611 = vmatpush2.bf16.msra.mxu0 0
        %612 = vmatprep.subr.bf16.mxu0 0
        %613 = vmatpush2.bf16.msra.mxu0 0
        %614 = vmatprep.subr.bf16.mxu0 0
        %615 = vmatpush2.bf16.msra.mxu0 0
        %616 = vmatprep.subr.bf16.mxu0 0
        %617 = vmatpush2.bf16.msra.mxu0 0
        %618 = vmatprep.subr.bf16.mxu0 0
        %619 = vmatpush2.bf16.msra.mxu0 0
        %620 = vmatprep.mubr.bf16.mxu0 0
        %621 = vmatmul.mubr.bf16.gmra.mxu0 %v538
        %v622 = vpop.f32.mrf.mxu0
        %v623 = vadd.f32 0.0, %v622
        %v624 = vpop.f32.mrf.mxu0
        %v625 = vpop.f32.mrf.mxu0
        %v626 = vpop.f32.mrf.mxu0
        %627 = vdwg.mxu0
        %v628 = vpack.c.bf16 %v623, %v623
        %v629 = vld [vmem:[#allocation5] sm:$0xf]
        %v630 = vld [vmem:[#allocation5 + $0x4] sm:$0xf]
        %v631 = vld [vmem:[#allocation5 + $0x8] sm:$0xf]
        %v632 = vld [vmem:[#allocation5 + $0xc] sm:$0xf]
        %v633 = vld [vmem:[#allocation5 + $0x10] sm:$0xf]
        %v634 = vld [vmem:[#allocation5 + $0x14] sm:$0xf]
        %v635 = vld [vmem:[#allocation5 + $0x18] sm:$0xf]
        %v636 = vld [vmem:[#allocation5 + $0x1c] sm:$0xf]
        %v637 = vld [vmem:[#allocation5 + $0x20] sm:$0xf]
        %v638 = vld [vmem:[#allocation5 + $0x24] sm:$0xf]
        %v639 = vld [vmem:[#allocation5 + $0x28] sm:$0xf]
        %v640 = vld [vmem:[#allocation5 + $0x2c] sm:$0xf]
        %v641 = vld [vmem:[#allocation5 + $0x30] sm:$0xf]
        %v642 = vld [vmem:[#allocation5 + $0x34] sm:$0xf]
        %v643 = vld [vmem:[#allocation5 + $0x38] sm:$0xf]
        %v644 = vld [vmem:[#allocation5 + $0x3c] sm:$0xf]
        %v645 = vld [vmem:[%s3] sm:$0x1]
        %v647 = vlaneseq
        %v648 = vshrl.u32 %v647, 7
        %v649 = vsub.s32 0, %v648
        %v650 = vrot.slane %v645, %v649
        %v668 = vunpack.c.l.b16 %v629
        %v669 = vunpack.c.l.b16 %v630
        %v670 = vunpack.c.l.b16 %v631
        %v671 = vunpack.c.l.b16 %v632
        %v672 = vunpack.c.l.b16 %v633
        %v673 = vunpack.c.l.b16 %v634
        %v674 = vunpack.c.l.b16 %v635
        %v675 = vunpack.c.l.b16 %v636
        %v676 = vunpack.c.l.b16 %v637
        %v677 = vunpack.c.l.b16 %v638
        %v678 = vunpack.c.l.b16 %v639
        %v679 = vunpack.c.l.b16 %v640
        %v680 = vunpack.c.l.b16 %v641
        %v681 = vunpack.c.l.b16 %v642
        %v682 = vunpack.c.l.b16 %v643
        %v683 = vunpack.c.l.b16 %v644
        %v684 = vpack.c.b16 %v669, %v668
        %v685 = vpack.c.b16 %v671, %v670
        %v686 = vpack.c.b16 %v673, %v672
        %v687 = vpack.c.b16 %v675, %v674
        %v688 = vpack.c.b16 %v677, %v676
        %v689 = vpack.c.b16 %v679, %v678
        %v690 = vpack.c.b16 %v681, %v680
        %v691 = vpack.c.b16 %v683, %v682
        %700 = vmatprep.subr.bf16.mxu0 0
        %701 = vmatpush1.bf16.msra.mxu0 %v691
        %702 = vmatprep.subr.bf16.mxu0 0
        %703 = vmatpush1.bf16.msra.mxu0 %v690
        %704 = vmatprep.subr.bf16.mxu0 0
        %705 = vmatpush1.bf16.msra.mxu0 %v689
        %706 = vmatprep.subr.bf16.mxu0 0
        %707 = vmatpush1.bf16.msra.mxu0 %v688
        %708 = vmatprep.subr.bf16.mxu0 0
        %709 = vmatpush1.bf16.msra.mxu0 %v687
        %710 = vmatprep.subr.bf16.mxu0 0
        %711 = vmatpush1.bf16.msra.mxu0 %v686
        %712 = vmatprep.subr.bf16.mxu0 0
        %713 = vmatpush1.bf16.msra.mxu0 %v685
        %714 = vmatprep.subr.bf16.mxu0 0
        %715 = vmatpush1.bf16.msra.mxu0 %v684
        %716 = vmatprep.subr.bf16.mxu0 0
        %717 = vmatpush2.bf16.msra.mxu0 0
        %718 = vmatprep.subr.bf16.mxu0 0
        %719 = vmatpush2.bf16.msra.mxu0 0
        %720 = vmatprep.subr.bf16.mxu0 0
        %721 = vmatpush2.bf16.msra.mxu0 0
        %722 = vmatprep.subr.bf16.mxu0 0
        %723 = vmatpush2.bf16.msra.mxu0 0
        %724 = vmatprep.subr.bf16.mxu0 0
        %725 = vmatpush2.bf16.msra.mxu0 0
        %726 = vmatprep.subr.bf16.mxu0 0
        %727 = vmatpush2.bf16.msra.mxu0 0
        %728 = vmatprep.subr.bf16.mxu0 0
        %729 = vmatpush2.bf16.msra.mxu0 0
        %730 = vmatprep.subr.bf16.mxu0 0
        %731 = vmatpush2.bf16.msra.mxu0 0
        %732 = vmatprep.mubr.bf16.mxu0 0
        %733 = vmatmul.mubr.bf16.gmra.mxu0 %v628
        %v734 = vpop.f32.mrf.mxu0
        %v735 = vadd.f32 %v650, %v734
        %v736 = vpop.f32.mrf.mxu0
        %v737 = vpop.f32.mrf.mxu0
        %v738 = vpop.f32.mrf.mxu0
        %739 = vdwg.mxu0
        %v740 = vmax.f32 %v735, 0.0
        %v741 = vpack.c.bf16 %v740, %v740
        %v742 = vld [vmem:[#allocation7] sm:$0xf]
        %v743 = vld [vmem:[#allocation7 + $0x4] sm:$0xf]
        %v744 = vld [vmem:[#allocation7 + $0x8] sm:$0xf]
        %v745 = vld [vmem:[#allocation7 + $0xc] sm:$0xf]
        %v746 = vld [vmem:[#allocation7 + $0x10] sm:$0xf]
        %v747 = vld [vmem:[#allocation7 + $0x14] sm:$0xf]
        %v748 = vld [vmem:[#allocation7 + $0x18] sm:$0xf]
        %v749 = vld [vmem:[#allocation7 + $0x1c] sm:$0xf]
        %v750 = vld [vmem:[#allocation7 + $0x20] sm:$0xf]
        %v751 = vld [vmem:[#allocation7 + $0x24] sm:$0xf]
        %v752 = vld [vmem:[#allocation7 + $0x28] sm:$0xf]
        %v753 = vld [vmem:[#allocation7 + $0x2c] sm:$0xf]
        %v754 = vld [vmem:[#allocation7 + $0x30] sm:$0xf]
        %v755 = vld [vmem:[#allocation7 + $0x34] sm:$0xf]
        %v756 = vld [vmem:[#allocation7 + $0x38] sm:$0xf]
        %v757 = vld [vmem:[#allocation7 + $0x3c] sm:$0xf]
        %v758 = vld [vmem:[%s5] sm:$0x1]
        %v760 = vlaneseq
        %v761 = vshrl.u32 %v760, 7
        %v762 = vsub.s32 0, %v761
        %v763 = vrot.slane %v758, %v762
        %v781 = vunpack.c.l.b16 %v742
        %v782 = vunpack.c.l.b16 %v743
        %v783 = vunpack.c.l.b16 %v744
        %v784 = vunpack.c.l.b16 %v745
        %v785 = vunpack.c.l.b16 %v746
        %v786 = vunpack.c.l.b16 %v747
        %v787 = vunpack.c.l.b16 %v748
        %v788 = vunpack.c.l.b16 %v749
        %v789 = vunpack.c.l.b16 %v750
        %v790 = vunpack.c.l.b16 %v751
        %v791 = vunpack.c.l.b16 %v752
        %v792 = vunpack.c.l.b16 %v753
        %v793 = vunpack.c.l.b16 %v754
        %v794 = vunpack.c.l.b16 %v755
        %v795 = vunpack.c.l.b16 %v756
        %v796 = vunpack.c.l.b16 %v757
        %v797 = vpack.c.b16 %v782, %v781
        %v798 = vpack.c.b16 %v784, %v783
        %v799 = vpack.c.b16 %v786, %v785
        %v800 = vpack.c.b16 %v788, %v787
        %v801 = vpack.c.b16 %v790, %v789
        %v802 = vpack.c.b16 %v792, %v791
        %v803 = vpack.c.b16 %v794, %v793
        %v804 = vpack.c.b16 %v796, %v795
        %813 = vmatprep.subr.bf16.mxu0 0
        %814 = vmatpush1.bf16.msra.mxu0 %v804
        %815 = vmatprep.subr.bf16.mxu0 0
        %816 = vmatpush1.bf16.msra.mxu0 %v803
        %817 = vmatprep.subr.bf16.mxu0 0
        %818 = vmatpush1.bf16.msra.mxu0 %v802
        %819 = vmatprep.subr.bf16.mxu0 0
        %820 = vmatpush1.bf16.msra.mxu0 %v801
        %821 = vmatprep.subr.bf16.mxu0 0
        %822 = vmatpush1.bf16.msra.mxu0 %v800
        %823 = vmatprep.subr.bf16.mxu0 0
        %824 = vmatpush1.bf16.msra.mxu0 %v799
        %825 = vmatprep.subr.bf16.mxu0 0
        %826 = vmatpush1.bf16.msra.mxu0 %v798
        %827 = vmatprep.subr.bf16.mxu0 0
        %828 = vmatpush1.bf16.msra.mxu0 %v797
        %829 = vmatprep.subr.bf16.mxu0 0
        %830 = vmatpush2.bf16.msra.mxu0 0
        %831 = vmatprep.subr.bf16.mxu0 0
        %832 = vmatpush2.bf16.msra.mxu0 0
        %833 = vmatprep.subr.bf16.mxu0 0
        %834 = vmatpush2.bf16.msra.mxu0 0
        %835 = vmatprep.subr.bf16.mxu0 0
        %836 = vmatpush2.bf16.msra.mxu0 0
        %837 = vmatprep.subr.bf16.mxu0 0
        %838 = vmatpush2.bf16.msra.mxu0 0
        %839 = vmatprep.subr.bf16.mxu0 0
        %840 = vmatpush2.bf16.msra.mxu0 0
        %841 = vmatprep.subr.bf16.mxu0 0
        %842 = vmatpush2.bf16.msra.mxu0 0
        %843 = vmatprep.subr.bf16.mxu0 0
        %844 = vmatpush2.bf16.msra.mxu0 0
        %845 = vmatprep.mubr.bf16.mxu0 0
        %846 = vmatmul.mubr.bf16.gmra.mxu0 %v741
        %v847 = vpop.f32.mrf.mxu0
        %v848 = vadd.f32 %v763, %v847
        %v849 = vpop.f32.mrf.mxu0
        %v850 = vpop.f32.mrf.mxu0
        %v851 = vpop.f32.mrf.mxu0
        %852 = vdwg.mxu0
        %v853 = vmax.f32 %v848, 0.0
        %v854 = vpack.c.bf16 %v853, %v853
        %v855 = vld [vmem:[#allocation8] sm:$0xf]
        %v856 = vld [vmem:[#allocation8 + $0x4] sm:$0xf]
        %v857 = vld [vmem:[#allocation8 + $0x8] sm:$0xf]
        %v858 = vld [vmem:[#allocation8 + $0xc] sm:$0xf]
        %v859 = vld [vmem:[#allocation8 + $0x10] sm:$0xf]
        %v860 = vld [vmem:[#allocation8 + $0x14] sm:$0xf]
        %v861 = vld [vmem:[#allocation8 + $0x18] sm:$0xf]
        %v862 = vld [vmem:[#allocation8 + $0x1c] sm:$0xf]
        %v863 = vld [vmem:[#allocation8 + $0x20] sm:$0xf]
        %v864 = vld [vmem:[#allocation8 + $0x24] sm:$0xf]
        %v865 = vld [vmem:[#allocation8 + $0x28] sm:$0xf]
        %v866 = vld [vmem:[#allocation8 + $0x2c] sm:$0xf]
        %v867 = vld [vmem:[#allocation8 + $0x30] sm:$0xf]
        %v868 = vld [vmem:[#allocation8 + $0x34] sm:$0xf]
        %v869 = vld [vmem:[#allocation8 + $0x38] sm:$0xf]
        %v870 = vld [vmem:[#allocation8 + $0x3c] sm:$0xf]
        %v871 = vld [vmem:[%s7] sm:$0x1]
        %v873 = vlaneseq
        %v874 = vshrl.u32 %v873, 7
        %v875 = vsub.s32 0, %v874
        %v876 = vrot.slane %v871, %v875
        %v894 = vunpack.c.l.b16 %v855
        %v895 = vunpack.c.l.b16 %v856
        %v896 = vunpack.c.l.b16 %v857
        %v897 = vunpack.c.l.b16 %v858
        %v898 = vunpack.c.l.b16 %v859
        %v899 = vunpack.c.l.b16 %v860
        %v900 = vunpack.c.l.b16 %v861
        %v901 = vunpack.c.l.b16 %v862
        %v902 = vunpack.c.l.b16 %v863
        %v903 = vunpack.c.l.b16 %v864
        %v904 = vunpack.c.l.b16 %v865
        %v905 = vunpack.c.l.b16 %v866
        %v906 = vunpack.c.l.b16 %v867
        %v907 = vunpack.c.l.b16 %v868
        %v908 = vunpack.c.l.b16 %v869
        %v909 = vunpack.c.l.b16 %v870
        %v910 = vpack.c.b16 %v895, %v894
        %v911 = vpack.c.b16 %v897, %v896
        %v912 = vpack.c.b16 %v899, %v898
        %v913 = vpack.c.b16 %v901, %v900
        %v914 = vpack.c.b16 %v903, %v902
        %v915 = vpack.c.b16 %v905, %v904
        %v916 = vpack.c.b16 %v907, %v906
        %v917 = vpack.c.b16 %v909, %v908
        %926 = vmatprep.subr.bf16.mxu0 0
        %927 = vmatpush1.bf16.msra.mxu0 %v917
        %928 = vmatprep.subr.bf16.mxu0 0
        %929 = vmatpush1.bf16.msra.mxu0 %v916
        %930 = vmatprep.subr.bf16.mxu0 0
        %931 = vmatpush1.bf16.msra.mxu0 %v915
        %932 = vmatprep.subr.bf16.mxu0 0
        %933 = vmatpush1.bf16.msra.mxu0 %v914
        %934 = vmatprep.subr.bf16.mxu0 0
        %935 = vmatpush1.bf16.msra.mxu0 %v913
        %936 = vmatprep.subr.bf16.mxu0 0
        %937 = vmatpush1.bf16.msra.mxu0 %v912
        %938 = vmatprep.subr.bf16.mxu0 0
        %939 = vmatpush1.bf16.msra.mxu0 %v911
        %940 = vmatprep.subr.bf16.mxu0 0
        %941 = vmatpush1.bf16.msra.mxu0 %v910
        %942 = vmatprep.subr.bf16.mxu0 0
        %943 = vmatpush2.bf16.msra.mxu0 0
        %944 = vmatprep.subr.bf16.mxu0 0
        %945 = vmatpush2.bf16.msra.mxu0 0
        %946 = vmatprep.subr.bf16.mxu0 0
        %947 = vmatpush2.bf16.msra.mxu0 0
        %948 = vmatprep.subr.bf16.mxu0 0
        %949 = vmatpush2.bf16.msra.mxu0 0
        %950 = vmatprep.subr.bf16.mxu0 0
        %951 = vmatpush2.bf16.msra.mxu0 0
        %952 = vmatprep.subr.bf16.mxu0 0
        %953 = vmatpush2.bf16.msra.mxu0 0
        %954 = vmatprep.subr.bf16.mxu0 0
        %955 = vmatpush2.bf16.msra.mxu0 0
        %956 = vmatprep.subr.bf16.mxu0 0
        %957 = vmatpush2.bf16.msra.mxu0 0
        %958 = vmatprep.mubr.bf16.mxu0 0
        %959 = vmatmul.mubr.bf16.gmra.mxu0 %v854
        %v960 = vpop.f32.mrf.mxu0
        %v961 = vadd.f32 %v876, %v960
        %v962 = vpop.f32.mrf.mxu0
        %v963 = vpop.f32.mrf.mxu0
        %v964 = vpop.f32.mrf.mxu0
        %965 = vdwg.mxu0
        %966 = vst [vmem:[%s355] sm:$0xff] %v961
        %s967 = sand.u32 %s206, 1
        %s968 = scalar_lea.sflag [#allocation4], %s967
        %s969 = sand.u32 %s206, 1
        %s970 = smul.addr %s969, 8
        %s971 = scalar_lea.vmem [#allocation10], %s970
        // Predicated region
        $region69: #{tpu_custom_call.1} parent=51 // pred_check
          %p972 = pneg %p216
        $region70: #{tpu_custom_call.1} parent=51 // pred_check_branch
          %974 = sbr.rel (%p972) target = $region72
        $region71: #{tpu_custom_call.1} parent=51 // pred_region
          %s976 = ssub.s32 128, 128
          %977 = vsyncadd %s968, %s976
          %s978 = smul.addr %s25, 128
          %s979 = scalar_lea.hbm %s8, %s978
          %s981 = sshll.u32 %s971, 4
          %s982 = int_to_ptr.vmem [resolvable:$true] %s981
          %984 = dma.vmem_to_hbm [thread:$0]  %s982, 128, %s979, %s968
        $region72: #{tpu_custom_call.1} parent=51 // pred_fallthru
          _
      $region52: #{tpu_custom_call.1} parent=5 // pred_fallthru
        _
      %p985 = scmp.le.s32.totalorder 2, %s20
      // Predicated region
      $region73: #{tpu_custom_call.1} parent=5 // pred_check
        %p986 = pneg %p985
      $region74: #{tpu_custom_call.1} parent=5 // pred_check_branch
        %988 = sbr.rel (%p986) target = $region76
      $region75: #{tpu_custom_call.1} parent=5 // pred_region
        %s989 = ssub.s32 %s20, 2
        // Predicated region
        $region77: #{tpu_custom_call.1} parent=75 // pred_check
          %p990 = pneg %p222
        $region78: #{tpu_custom_call.1} parent=75 // pred_check_branch
          %992 = sbr.rel (%p990) target = $region80
        $region79: #{tpu_custom_call.1} parent=75 // pred_region
          %s993 = sand.u32 %s207, 1
          %s994 = scalar_lea.sflag [#allocation4], %s993
          %s995 = sand.u32 %s207, 1
          %s996 = smul.addr %s995, 8
          %s997 = scalar_lea.vmem [#allocation10], %s996
          %998 = dma.done %s994, 128
        $region80: #{tpu_custom_call.1} parent=75 // pred_fallthru
          _
      $region76: #{tpu_custom_call.1} parent=5 // pred_fallthru
        _
    $region6: #{tpu_custom_call.1} parent=1 // loop_footer
      %s24 = sadd.s32 1, %s20
    $region7: #{tpu_custom_call.1} parent=1 // loop_footer_branch
      %19 = sbr.rel target = $region3
    $region8: #{tpu_custom_call.1} parent=1 // loop_exit
      _
    %999 = vsyncpa [#allocation3], 1
    %s1000 = scalar_lea.sflag [#allocation3], 1
    %1001 = vsyncpa %s1000, 1
    %1002 = vsyncpa [#allocation6], 1
    %1003 = vsyncpa [#allocation9], 1
    %1004 = vsyncpa [#allocation4], 1
    %s1005 = scalar_lea.sflag [#allocation4], 1
    %1006 = vsyncpa %s1005, 1

</llo_original>
